<compile_context>
chip_gen: v5e
topology: v5e:2x2
jax: 0.10.0
libtpu: 0.0.40
codegen_flags: <defaults>
</compile_context>

<pallas_src>
import jax
import jax.numpy as jnp
from jax.experimental import pallas as pl
from jax.experimental.pallas import tpu as pltpu

# ----- small shapes consistent with the module -----
BATCH = 2
SEQ = 8
HIDDEN = 32


def _bert_pooler_kernel(cls_ref, wt_ref, b_ref, o_ref):
    # cls_ref: (tm, H) CLS rows, wt_ref: (H, H) = W.T, b_ref: (1, H) bias.
    pooled = jnp.dot(cls_ref[...], wt_ref[...],
                     preferred_element_type=jnp.float32) + b_ref[...]
    o_ref[...] = jnp.tanh(pooled)        # EUP transcendental, f32


def make_bert_pooler(weight, bias, *, block_b=256):
    """Build a jitted pooler.  `weight` is PyTorch layout (out, in); `bias` (H,).

    The transpose and bias reshape happen ONCE here (parameter-load time),
    not per forward call.
    """
    H = weight.shape[0]
    wt = jnp.asarray(weight).T            # (H, H) = W.T, hoisted constant
    b2 = jnp.asarray(bias).reshape(1, H)  # (1, H) 2-D VMEM tile

    @jax.jit
    def pooler(hidden_states):
        B = hidden_states.shape[0]
        # Host-side CLS slice: free XLA slice, avoids DMAing S x unused bytes
        # and removes the in-kernel x[:, 0, :] relayout.
        cls = hidden_states[:, 0, :]                       # (B, H)

        # Batch tile: whole batch if small / not divisible, else a
        # sublane-aligned 256-row tile so the grid has something to pipeline.
        if B <= block_b or B % block_b != 0:
            tm, grid = B, (1,)
        else:
            tm, grid = block_b, (B // block_b,)

        return pl.pallas_call(
            _bert_pooler_kernel,
            out_shape=jax.ShapeDtypeStruct((B, H), jnp.float32),
            grid=grid,
            in_specs=[
                pl.BlockSpec((tm, H), lambda i: (i, 0)),   # CLS rows
                pl.BlockSpec((H, H), lambda i: (0, 0)),    # W.T (resident)
                pl.BlockSpec((1, H), lambda i: (0, 0)),    # bias (resident)
            ],
            out_specs=pl.BlockSpec((tm, H), lambda i: (i, 0)),
            compiler_params=pltpu.CompilerParams(
                dimension_semantics=("parallel",)),        # shards TCs on v7x
        )(cls, wt, b2)

    return pooler


def reference(hidden_states, weight, bias):
    """Pure-JAX mirror of the PyTorch forward."""
    first = hidden_states[:, 0]                            # (B, H)
    return jnp.tanh(first @ weight.T + bias)


if __name__ == "__main__":
    key = jax.random.PRNGKey(0)
    kx, kw, kb = jax.random.split(key, 3)
    x = jax.random.normal(kx, (BATCH, SEQ, HIDDEN), jnp.float32)
    w = jax.random.normal(kw, (HIDDEN, HIDDEN), jnp.float32) * 0.02
    b = jax.random.normal(kb, (HIDDEN,), jnp.float32) * 0.02

    pooler = make_bert_pooler(w, b)
    out = jax.block_until_ready(pooler(x))

    ref = reference(x, w, b)
    assert out.shape == (BATCH, HIDDEN)
    assert jnp.allclose(out, ref, atol=1e-5, rtol=1e-5), "mismatch vs JAX reference"
    print("KERNEL_OK")
</pallas_src>

<mosaic_0001>
module attributes {stable_mosaic.version = 11 : i64} {
  func.func @_bert_pooler_kernel(%arg0: i32, %arg1: memref<2x32xf32, #tpu.memory_space<vmem>>, %arg2: memref<32x32xf32, #tpu.memory_space<vmem>>, %arg3: memref<1x32xf32, #tpu.memory_space<vmem>>, %arg4: memref<2x32xf32, #tpu.memory_space<vmem>>) attributes {dimension_semantics = [#tpu.dimension_semantics<parallel>], iteration_bounds = array<i64: 1>, scalar_prefetch = 0 : i64, scratch_operands = 0 : i64, tpu.core_type = #tpu.core_type<tc>, window_params = [{transform_indices = @transform_0, window_bounds = array<i64: 2, 32>}, {pipeline_mode = #tpu.pipeline_mode<synchronous>, transform_indices = @transform_1, window_bounds = array<i64: 32, 32>}, {pipeline_mode = #tpu.pipeline_mode<synchronous>, transform_indices = @transform_2, window_bounds = array<i64: 1, 32>}, {transform_indices = @transform_3, window_bounds = array<i64: 2, 32>}]} {
    %c0 = arith.constant 0 : index
    %c0_0 = arith.constant 0 : index
    %0 = vector.load %arg1[%c0, %c0_0] : memref<2x32xf32, #tpu.memory_space<vmem>>, vector<2x32xf32>
    %c0_1 = arith.constant 0 : index
    %c0_2 = arith.constant 0 : index
    %1 = vector.load %arg2[%c0_1, %c0_2] : memref<32x32xf32, #tpu.memory_space<vmem>>, vector<32x32xf32>
    %cst = arith.constant dense<0.000000e+00> : vector<2x32xf32>
    %2 = tpu.matmul %0, %1, %cst {dimension_numbers = #tpu.dot_dimension_numbers<[1], [0], [0], [1], [0, 0, 1, 1], [], []>} : vector<2x32xf32>, vector<32x32xf32>, vector<2x32xf32> -> vector<2x32xf32>
    %c0_3 = arith.constant 0 : index
    %c0_4 = arith.constant 0 : index
    %3 = vector.load %arg3[%c0_3, %c0_4] : memref<1x32xf32, #tpu.memory_space<vmem>>, vector<1x32xf32>
    %4 = vector.broadcast %3 : vector<1x32xf32> to vector<2x32xf32>
    %5 = arith.addf %2, %4 : vector<2x32xf32>
    %6 = math.tanh %5 : vector<2x32xf32>
    %c0_5 = arith.constant 0 : index
    %c0_6 = arith.constant 0 : index
    %7 = vector.load %arg4[%c0_5, %c0_6] : memref<2x32xf32, #tpu.memory_space<vmem>>, vector<2x32xf32>
    tpu.vector_store %arg4[%c0_5, %c0_6], %6 {strides = array<i32>} : memref<2x32xf32, #tpu.memory_space<vmem>>, vector<2x32xf32>,
    return
  }
  func.func @transform_0(%arg0: i32) -> (i32, i32) {
    %c0_i32 = arith.constant 0 : i32
    %c0_i32_0 = arith.constant 0 : i32
    return %arg0, %c0_i32 : i32, i32
  }
  func.func @transform_1(%arg0: i32) -> (i32, i32) {
    %c0_i32 = arith.constant 0 : i32
    %c0_i32_0 = arith.constant 0 : i32
    %c0_i32_1 = arith.constant 0 : i32
    return %c0_i32, %c0_i32_0 : i32, i32
  }
  func.func @transform_2(%arg0: i32) -> (i32, i32) {
    %c0_i32 = arith.constant 0 : i32
    %c0_i32_0 = arith.constant 0 : i32
    %c0_i32_1 = arith.constant 0 : i32
    return %c0_i32, %c0_i32_0 : i32, i32
  }
  func.func @transform_3(%arg0: i32) -> (i32, i32) {
    %c0_i32 = arith.constant 0 : i32
    %c0_i32_0 = arith.constant 0 : i32
    return %arg0, %c0_i32 : i32, i32
  }
}

</mosaic_0001>

<llo_original>
// kernel: pooler.1
$region0: #{pooler.1}
  #allocation0 [shape = 'u32[]', space=smem, size = 0x4, offset = 0x4, fixed_abs, tag = 'smem constant byte address 0x4 - core index']
  #allocation1 [shape = 'u32[72,128]{1,0:T(1,128)}', space=vmem, size = 0x9000, scoped, tag = 'internal scratch']
  %s0 = inlined_call_operand.vmem [shape: f32[2,32], index: 0, kind: input, shape index: {}]
  %s1 = inlined_call_operand.hbm [shape: f32[32,32], index: 1, kind: input, shape index: {}]
  %s2 = inlined_call_operand.vmem [shape: f32[1,32], index: 2, kind: input, shape index: {}]
  %s3 = inlined_call_operand.hbm [shape: f32[2,32], index: 3, kind: output, shape index: {}]
  %s4 = sld [smem:[#allocation0]]
  $region26: #{pooler.1} parent=0
    _
  %s6 = ssub.s32 1, %s4
  %s7 = scalar_select 0, %s6, %s4
  $region1: #{pooler.1} parent=0
    #allocation2 [shape = 'u8[16384]{0}', space=vmem, size = 0x4000, scoped, tag = 'input window, operand 1, single buffered']
    #allocation3 [shape = 's32[1]{0}', space=sflag, size = 0x4, scoped, tag = 'scoped memory for pooler.1']
    #allocation4 [shape = 's32[1]{0}', space=sflag, size = 0x4, scoped, tag = 'scoped memory for pooler.1']
    #allocation5 [shape = 'u8[1024]{0}', space=vmem, size = 0x400, scoped, tag = 'output window, operand 0, single buffered']
    %8 = vsyncpa [#allocation3], 0
    %9 = vsyncpa [#allocation4], 0
    // Predicated region
    $region2: #{pooler.1} parent=1 // pred_check
      _
    $region3: #{pooler.1} parent=1 // pred_check_branch
      %11 = sbr.rel (0) target = $region5
    $region4: #{pooler.1} parent=1 // pred_region
      _
    $region5: #{pooler.1} parent=1 // pred_fallthru
      _
    // Predicated region
    $region6: #{pooler.1} parent=1 // pred_check
      _
    $region7: #{pooler.1} parent=1 // pred_check_branch
      %13 = sbr.rel (0) target = $region9
    $region8: #{pooler.1} parent=1 // pred_region
      %15 = vsyncadd [#allocation3], 0
      %s16 = sshll.u32 %s1, 4
      %s17 = int_to_ptr.hbm [resolvable:$true] %s16
      %s18 = sshll.u32 [#allocation2], 4
      %s19 = int_to_ptr.vmem [resolvable:$true] %s18
      %24 = dma.hbm_to_vmem [thread:$0]  %s17, 512, %s19, [#allocation3], 128, 128, 8
    $region9: #{pooler.1} parent=1 // pred_fallthru
      _
    // Predicated region
    $region10: #{pooler.1} parent=1 // pred_check
      _
    $region11: #{pooler.1} parent=1 // pred_check_branch
      %26 = sbr.rel (0) target = $region13
    $region12: #{pooler.1} parent=1 // pred_region
      _
    $region13: #{pooler.1} parent=1 // pred_fallthru
      _
    // Predicated region
    $region14: #{pooler.1} parent=1 // pred_check
      _
    $region15: #{pooler.1} parent=1 // pred_check_branch
      %28 = sbr.rel (0) target = $region17
    $region16: #{pooler.1} parent=1 // pred_region
      %30 = dma.done [#allocation3], 512
    $region17: #{pooler.1} parent=1 // pred_fallthru
      _
    %v31 = vld [vmem:[%s0] sm:$0x3]
    %v32 = vld [vmem:[#allocation2] sm:$0xff]
    %v33 = vld [vmem:[#allocation2 + $0x8] sm:$0xff]
    %v34 = vld [vmem:[#allocation2 + $0x10] sm:$0xff]
    %v35 = vld [vmem:[#allocation2 + $0x18] sm:$0xff]
    %v36 = vld [vmem:[%s2] sm:$0x1]
    %v38 = vperm.slane %v36, 0
    %vm40 = vcmask 261120
    %v42 = vsel %vm40, %v31, 0
    %44 = vmatpush.msra.mxu0 0.0
    %45 = vmatpush.msra.mxu0 0.0
    %46 = vmatpush.msra.mxu0 0.0
    %47 = vmatpush.msra.mxu0 0.0
    %48 = vmatpush.msra.mxu0 0.0
    %49 = vmatpush.msra.mxu0 0.0
    %50 = vmatpush.msra.mxu0 0.0
    %51 = vmatpush.msra.mxu0 0.0
    %52 = vmatpush.msra.mxu0 0.0
    %53 = vmatpush.msra.mxu0 0.0
    %54 = vmatpush.msra.mxu0 0.0
    %55 = vmatpush.msra.mxu0 0.0
    %56 = vmatpush.msra.mxu0 %v35
    %57 = vmatpush.msra.mxu0 %v34
    %58 = vmatpush.msra.mxu0 %v33
    %59 = vmatpush.msra.mxu0 %v32
    %60 = vmatmul.f32.gmra.mxu0 %v42
    %v61 = vpop.f32.mrf.mxu0
    %v62 = vadd.f32 %v38, %v61
    %63 = vdwg.mxu0
    %v64 = vtanh.pop %v62
    %vm65 = vcmask 254976
    %66 = vst.msk [vmem:[#allocation5] sm:$0x3] %vm65, %v64
    // Predicated region
    $region18: #{pooler.1} parent=1 // pred_check
      _
    $region19: #{pooler.1} parent=1 // pred_check_branch
      %68 = sbr.rel (0) target = $region21
    $region20: #{pooler.1} parent=1 // pred_region
      %70 = vsyncadd [#allocation4], 0
      %s72 = sshll.u32 [#allocation5], 4
      %s73 = int_to_ptr.vmem [resolvable:$true] %s72
      %s74 = sshll.u32 %s3, 4
      %s75 = int_to_ptr.hbm [resolvable:$true] %s74
      %77 = dma.vmem_to_hbm [thread:$0]  %s73, 32, %s75, [#allocation4]
    $region21: #{pooler.1} parent=1 // pred_fallthru
      _
    // Predicated region
    $region22: #{pooler.1} parent=1 // pred_check
      _
    $region23: #{pooler.1} parent=1 // pred_check_branch
      %79 = sbr.rel (0) target = $region25
    $region24: #{pooler.1} parent=1 // pred_region
      %81 = dma.done [#allocation4], 32
    $region25: #{pooler.1} parent=1 // pred_fallthru
      _
    %82 = vsyncpa [#allocation3], 1
    %83 = vsyncpa [#allocation4], 1

</llo_original>
